<compile_context>
chip_gen: v6e
topology: v6e:2x2x1
jax: 0.10.0
libtpu: 0.0.40
codegen_flags: <defaults>
</compile_context>

<pallas_src>
import jax
import jax.numpy as jnp
from jax import lax
from jax.experimental import pallas as pl
from jax.experimental.pallas import tpu as pltpu


# ---------------------------------------------------------------------------
# Batched kernel: one tile of (i1, i2) pairs per grid step.
# ---------------------------------------------------------------------------
def _batched_kernel(i1_ref, i2_ref, w1_ref, w2t_ref, h1t_ref, out_t_ref):
    items_n = w1_ref.shape[1]
    tb = h1t_ref.shape[1]                      # tile batch size (lanes)
    readouts = out_t_ref.shape[0]

    idx1 = i1_ref[...]                         # (1, tb) int32
    idx2 = i2_ref[...]                         # (1, tb) int32

    # One-hot difference matrix, transposed: D^T[k, b] = [k==i1[b]] - [k==i2[b]]
    k = lax.broadcasted_iota(jnp.int32, (items_n, tb), 0)
    d_t = (k == idx1).astype(jnp.float32) - (k == idx2).astype(jnp.float32)

    # Hidden layer: h1^T = relu(W1 @ D^T)  -> single small MXU matmul.
    w1 = w1_ref[...]                           # (h1_size, items_n)
    h1_t = jnp.maximum(
        jnp.dot(w1, d_t, preferred_element_type=jnp.float32), 0.0)  # (h1, tb)
    h1t_ref[...] = h1_t                        # single lane-dense store

    # Readout: out^T[r, :] = sum_k W2[r, k] * h1^T[k, :]
    # readouts is tiny (1 or 2): per-head VPU multiply + sublane reduce on the
    # in-register h1^T (no h1 readback from VMEM, no degenerate-M matmul).
    w2t = w2t_ref[...]                         # (h1_size, readouts)
    heads = [jnp.sum(h1_t * w2t[:, r:r + 1], axis=0, keepdims=True)
             for r in range(readouts)]         # each (1, tb)
    out_t_ref[...] = heads[0] if readouts == 1 else jnp.concatenate(heads, axis=0)


# ---------------------------------------------------------------------------
# Batched forward: many (i1, i2) pairs per call.
# ---------------------------------------------------------------------------
def network_forward_batched(items_1, items_2, w1, w2, *, block_b=None):
    """Forward pass for a batch of (item_1, item_2) index pairs.

    :param items_1: (B,) int indices of the first items
    :param items_2: (B,) int indices of the second items
    :param w1: layer_1.weight, shape (h1_size, items_n)   (natural PyTorch layout)
    :param w2: layer_2.weight, shape (readouts, h1_size)  (natural PyTorch layout)
    :return: (h1, out) with shapes (B, h1_size), (B, readouts)
    """
    h1_size, items_n = w1.shape
    readouts = w2.shape[0]
    b = items_1.shape[0]

    # Clamp indices: Pallas performs no runtime bounds check on VMEM refs.
    items_1 = jnp.clip(items_1.astype(jnp.int32), 0, items_n - 1)
    items_2 = jnp.clip(items_2.astype(jnp.int32), 0, items_n - 1)

    # Tile selection: big tiles amortize the ~0.35us/grid-step overhead; for
    # large batches keep >=2 grid steps so the "parallel" batch axis can shard
    # across v7x's two TensorCores.
    if block_b is None:
        block_b = 512 if b > 512 else -(-b // 128) * 128
    block_b = max(128, -(-int(block_b) // 128) * 128)     # multiple of 128 lanes

    b_pad = pl.cdiv(b, block_b) * block_b
    pad = b_pad - b
    if pad:
        items_1 = jnp.pad(items_1, (0, pad))               # pad with valid index 0
        items_2 = jnp.pad(items_2, (0, pad))
    i1p = items_1.reshape(1, b_pad)
    i2p = items_2.reshape(1, b_pad)

    # Tiny (<= (h1,2)) transpose of the readout weights; hoistable to model state.
    w2t = jnp.asarray(w2.T)                                 # (h1_size, readouts)

    grid = b_pad // block_b
    h1_t, out_t = pl.pallas_call(
        _batched_kernel,
        grid=(grid,),
        in_specs=[
            pl.BlockSpec((1, block_b), lambda g: (0, g)),            # items_1 tile
            pl.BlockSpec((1, block_b), lambda g: (0, g)),            # items_2 tile
            pl.BlockSpec((h1_size, items_n), lambda g: (0, 0)),      # W1 (resident)
            pl.BlockSpec((h1_size, readouts), lambda g: (0, 0)),     # W2^T (resident)
        ],
        out_specs=(
            pl.BlockSpec((h1_size, block_b), lambda g: (0, g)),      # h1^T tile
            pl.BlockSpec((readouts, block_b), lambda g: (0, g)),     # out^T tile
        ),
        out_shape=(
            jax.ShapeDtypeStruct((h1_size, b_pad), jnp.float32),
            jax.ShapeDtypeStruct((readouts, b_pad), jnp.float32),
        ),
        compiler_params=pltpu.CompilerParams(
            dimension_semantics=("parallel",)),
    )(i1p, i2p, w1, w2t)

    # Wrapper-side layout plumbing: back to (B, h1_size) / (B, readouts).
    return h1_t[:, :b].T, out_t[:, :b].T


# ---------------------------------------------------------------------------
# Single-pair forward (routes through the batched kernel; no dedicated
# pallas_call launch path for a scalar-sized workload).
# ---------------------------------------------------------------------------
def network_forward(item_1, item_2, w1, w2):
    """Single (item_1, item_2) forward pass.

    :return: (h1, out) with shapes (h1_size,), (readouts,)
    """
    i1 = jnp.asarray([item_1], dtype=jnp.int32)
    i2 = jnp.asarray([item_2], dtype=jnp.int32)
    h1, out = network_forward_batched(i1, i2, w1, w2, block_b=128)
    return h1[0], out[0]


if __name__ == "__main__":
    # Module hyper-parameters (small, consistent with the PyTorch __init__)
    items_n = 8
    h1_size = 32
    readouts = 1
    w1_weight_std = 0.5
    w2_weight_std = 0.1

    key = jax.random.PRNGKey(0)
    k1, k2 = jax.random.split(key)
    # Deterministic "torch.nn.init.normal_" analogue (natural PyTorch layouts)
    w1 = w1_weight_std * jax.random.normal(k1, (h1_size, items_n), dtype=jnp.float32)
    w2 = w2_weight_std * jax.random.normal(k2, (readouts, h1_size), dtype=jnp.float32)

    # ---- single pair ------------------------------------------------------
    item_1, item_2 = 3, 5
    h1, out = network_forward(item_1, item_2, w1, w2)
    jax.block_until_ready((h1, out))

    x1 = jax.nn.one_hot(item_1, items_n, dtype=jnp.float32)
    x2 = jax.nn.one_hot(item_2, items_n, dtype=jnp.float32)
    h1_ref = jnp.maximum(x1 @ w1.T - x2 @ w1.T, 0.0)
    out_ref = h1_ref @ w2.T
    assert jnp.allclose(h1, h1_ref, atol=1e-5), "h1 mismatch"
    assert jnp.allclose(out, out_ref, atol=1e-5), "out mismatch"

    # ---- batched: all items_n**2 (i, j) pairs (Network.evaluate pattern) ---
    ii, jj = jnp.meshgrid(jnp.arange(items_n), jnp.arange(items_n), indexing="ij")
    items_1 = ii.reshape(-1).astype(jnp.int32)   # (64,)  -> padded to 128 in-kernel
    items_2 = jj.reshape(-1).astype(jnp.int32)   # (64,)
    h1_b, out_b = network_forward_batched(items_1, items_2, w1, w2)
    jax.block_until_ready((h1_b, out_b))

    x1b = jax.nn.one_hot(items_1, items_n, dtype=jnp.float32)
    x2b = jax.nn.one_hot(items_2, items_n, dtype=jnp.float32)
    h1b_ref = jnp.maximum((x1b - x2b) @ w1.T, 0.0)
    outb_ref = h1b_ref @ w2.T
    assert jnp.allclose(h1_b, h1b_ref, atol=1e-5), "batched h1 mismatch"
    assert jnp.allclose(out_b, outb_ref, atol=1e-5), "batched out mismatch"

    # ---- batched, two readout heads (readouts=2 path) -----------------------
    w2_2 = w2_weight_std * jax.random.normal(k2, (2, h1_size), dtype=jnp.float32)
    h1_b2, out_b2 = network_forward_batched(items_1, items_2, w1, w2_2)
    jax.block_until_ready((h1_b2, out_b2))
    outb2_ref = h1b_ref @ w2_2.T
    assert jnp.allclose(out_b2, outb2_ref, atol=1e-5), "readouts=2 out mismatch"

    print("KERNEL_OK")
</pallas_src>

<mosaic_0001>
module attributes {stable_mosaic.version = 11 : i64} {
  func.func @_batched_kernel(%arg0: i32, %arg1: memref<1x128xi32, #tpu.memory_space<vmem>>, %arg2: memref<1x128xi32, #tpu.memory_space<vmem>>, %arg3: memref<32x8xf32, #tpu.memory_space<vmem>>, %arg4: memref<32x1xf32, #tpu.memory_space<vmem>>, %arg5: memref<32x128xf32, #tpu.memory_space<vmem>>, %arg6: memref<1x128xf32, #tpu.memory_space<vmem>>) attributes {dimension_semantics = [#tpu.dimension_semantics<parallel>], iteration_bounds = array<i64: 1>, scalar_prefetch = 0 : i64, scratch_operands = 0 : i64, tpu.core_type = #tpu.core_type<tc>, window_params = [{transform_indices = @transform_0, window_bounds = array<i64: 1, 128>}, {transform_indices = @transform_1, window_bounds = array<i64: 1, 128>}, {pipeline_mode = #tpu.pipeline_mode<synchronous>, transform_indices = @transform_2, window_bounds = array<i64: 32, 8>}, {pipeline_mode = #tpu.pipeline_mode<synchronous>, transform_indices = @transform_3, window_bounds = array<i64: 32, 1>}, {transform_indices = @transform_4, window_bounds = array<i64: 32, 128>}, {transform_indices = @transform_5, window_bounds = array<i64: 1, 128>}]} {
    %c0 = arith.constant 0 : index
    %c0_0 = arith.constant 0 : index
    %0 = vector.load %arg1[%c0, %c0_0] : memref<1x128xi32, #tpu.memory_space<vmem>>, vector<1x128xi32>
    %c0_1 = arith.constant 0 : index
    %c0_2 = arith.constant 0 : index
    %1 = vector.load %arg2[%c0_1, %c0_2] : memref<1x128xi32, #tpu.memory_space<vmem>>, vector<1x128xi32>
    %2 = tpu.iota {dimensions = array<i32: 0>} : vector<8x128xi32>
    %3 = vector.broadcast %0 : vector<1x128xi32> to vector<8x128xi32>
    %4 = arith.cmpi eq, %2, %3 : vector<8x128xi32>
    %5 = arith.extui %4 : vector<8x128xi1> to vector<8x128xi32>
    %6 = arith.sitofp %5 : vector<8x128xi32> to vector<8x128xf32>
    %7 = vector.broadcast %1 : vector<1x128xi32> to vector<8x128xi32>
    %8 = arith.cmpi eq, %2, %7 : vector<8x128xi32>
    %9 = arith.extui %8 : vector<8x128xi1> to vector<8x128xi32>
    %10 = arith.sitofp %9 : vector<8x128xi32> to vector<8x128xf32>
    %11 = arith.subf %6, %10 : vector<8x128xf32>
    %c0_3 = arith.constant 0 : index
    %c0_4 = arith.constant 0 : index
    %12 = vector.load %arg3[%c0_3, %c0_4] : memref<32x8xf32, #tpu.memory_space<vmem>>, vector<32x8xf32>
    %cst = arith.constant dense<0.000000e+00> : vector<32x128xf32>
    %13 = tpu.matmul %12, %11, %cst {dimension_numbers = #tpu.dot_dimension_numbers<[1], [0], [0], [1], [0, 0, 1, 1], [], []>} : vector<32x8xf32>, vector<8x128xf32>, vector<32x128xf32> -> vector<32x128xf32>
    %cst_5 = arith.constant 0.000000e+00 : f32
    %14 = vector.broadcast %cst_5 : f32 to vector<32x128xf32>
    %15 = arith.maximumf %13, %14 : vector<32x128xf32>
    %c0_6 = arith.constant 0 : index
    %c0_7 = arith.constant 0 : index
    %16 = vector.load %arg5[%c0_6, %c0_7] : memref<32x128xf32, #tpu.memory_space<vmem>>, vector<32x128xf32>
    tpu.vector_store %arg5[%c0_6, %c0_7], %15 {strides = array<i32>} : memref<32x128xf32, #tpu.memory_space<vmem>>, vector<32x128xf32>,
    %c0_8 = arith.constant 0 : index
    %c0_9 = arith.constant 0 : index
    %17 = vector.load %arg4[%c0_8, %c0_9] : memref<32x1xf32, #tpu.memory_space<vmem>>, vector<32x1xf32>
    %18 = vector.broadcast %17 : vector<32x1xf32> to vector<32x128xf32>
    %19 = arith.mulf %15, %18 : vector<32x128xf32>
    %cst_10 = arith.constant dense<0.000000e+00> : vector<128xf32>
    %20 = vector.multi_reduction <add>, %19, %cst_10 [0] : vector<32x128xf32> to vector<128xf32>
    %21 = vector.shape_cast %20 : vector<128xf32> to vector<1x128xf32>
    %c0_11 = arith.constant 0 : index
    %c0_12 = arith.constant 0 : index
    %22 = vector.load %arg6[%c0_11, %c0_12] : memref<1x128xf32, #tpu.memory_space<vmem>>, vector<1x128xf32>
    tpu.vector_store %arg6[%c0_11, %c0_12], %21 {strides = array<i32>} : memref<1x128xf32, #tpu.memory_space<vmem>>, vector<1x128xf32>,
    return
  }
  func.func @transform_0(%arg0: i32) -> (i32, i32) {
    %c0_i32 = arith.constant 0 : i32
    %c0_i32_0 = arith.constant 0 : i32
    return %c0_i32, %arg0 : i32, i32
  }
  func.func @transform_1(%arg0: i32) -> (i32, i32) {
    %c0_i32 = arith.constant 0 : i32
    %c0_i32_0 = arith.constant 0 : i32
    return %c0_i32, %arg0 : i32, i32
  }
  func.func @transform_2(%arg0: i32) -> (i32, i32) {
    %c0_i32 = arith.constant 0 : i32
    %c0_i32_0 = arith.constant 0 : i32
    %c0_i32_1 = arith.constant 0 : i32
    return %c0_i32, %c0_i32_0 : i32, i32
  }
  func.func @transform_3(%arg0: i32) -> (i32, i32) {
    %c0_i32 = arith.constant 0 : i32
    %c0_i32_0 = arith.constant 0 : i32
    %c0_i32_1 = arith.constant 0 : i32
    return %c0_i32, %c0_i32_0 : i32, i32
  }
  func.func @transform_4(%arg0: i32) -> (i32, i32) {
    %c0_i32 = arith.constant 0 : i32
    %c0_i32_0 = arith.constant 0 : i32
    return %c0_i32, %arg0 : i32, i32
  }
  func.func @transform_5(%arg0: i32) -> (i32, i32) {
    %c0_i32 = arith.constant 0 : i32
    %c0_i32_0 = arith.constant 0 : i32
    return %c0_i32, %arg0 : i32, i32
  }
}

</mosaic_0001>

<llo_original>
// kernel: tpu_custom_call.1
$region0: #{tpu_custom_call.1}
  #allocation0 [shape = 'u32[]', space=smem, size = 0x4, offset = 0x4, fixed_abs, tag = 'smem constant byte address 0x4 - core index']
  #allocation1 [shape = 'u32[144,128]{1,0:T(1,128)}', space=vmem, size = 0x12000, scoped, tag = 'internal scratch']
  %s0 = inlined_call_operand.vmem [shape: s32[1,128], index: 0, kind: input, shape index: {}]
  %s1 = inlined_call_operand.vmem [shape: s32[1,128], index: 1, kind: input, shape index: {}]
  %s2 = inlined_call_operand.vmem [shape: f32[32,8], index: 2, kind: input, shape index: {}]
  %s3 = inlined_call_operand.vmem [shape: f32[32,1], index: 3, kind: input, shape index: {}]
  %s4 = inlined_call_operand.hbm [shape: f32[32,128], index: 4, kind: output, shape index: {0}]
  %s5 = inlined_call_operand.hbm [shape: f32[1,128], index: 5, kind: output, shape index: {1}]
  %6 = xla_tuple %s4, %s5
  %s7 = sld [smem:[#allocation0]]
  $region34: #{tpu_custom_call.1} parent=0
    _
  %s9 = ssub.s32 1, %s7
  %s10 = scalar_select 0, %s9, %s7
  $region1: #{tpu_custom_call.1} parent=0
    #allocation2 [shape = 'u8[16384]{0}', space=vmem, size = 0x4000, scoped, tag = 'output window, operand 0, single buffered']
    #allocation3 [shape = 's32[1]{0}', space=sflag, size = 0x4, scoped, tag = 'scoped memory for tpu_custom_call.1']
    #allocation4 [shape = 'u8[512]{0}', space=vmem, size = 0x400, scoped, tag = 'output window, operand 1, single buffered']
    #allocation5 [shape = 's32[1]{0}', space=sflag, size = 0x4, scoped, tag = 'scoped memory for tpu_custom_call.1']
    %11 = vsyncpa [#allocation3], 0
    %12 = vsyncpa [#allocation5], 0
    // Predicated region
    $region2: #{tpu_custom_call.1} parent=1 // pred_check
      _
    $region3: #{tpu_custom_call.1} parent=1 // pred_check_branch
      %14 = sbr.rel (0) target = $region5
    $region4: #{tpu_custom_call.1} parent=1 // pred_region
      _
    $region5: #{tpu_custom_call.1} parent=1 // pred_fallthru
      _
    // Predicated region
    $region6: #{tpu_custom_call.1} parent=1 // pred_check
      _
    $region7: #{tpu_custom_call.1} parent=1 // pred_check_branch
      %16 = sbr.rel (0) target = $region9
    $region8: #{tpu_custom_call.1} parent=1 // pred_region
      _
    $region9: #{tpu_custom_call.1} parent=1 // pred_fallthru
      _
    // Predicated region
    $region10: #{tpu_custom_call.1} parent=1 // pred_check
      _
    $region11: #{tpu_custom_call.1} parent=1 // pred_check_branch
      %18 = sbr.rel (0) target = $region13
    $region12: #{tpu_custom_call.1} parent=1 // pred_region
      _
    $region13: #{tpu_custom_call.1} parent=1 // pred_fallthru
      _
    // Predicated region
    $region14: #{tpu_custom_call.1} parent=1 // pred_check
      _
    $region15: #{tpu_custom_call.1} parent=1 // pred_check_branch
      %20 = sbr.rel (0) target = $region17
    $region16: #{tpu_custom_call.1} parent=1 // pred_region
      _
    $region17: #{tpu_custom_call.1} parent=1 // pred_fallthru
      _
    %v21 = vld [vmem:[%s0] sm:$0x1]
    %v22 = vld [vmem:[%s1] sm:$0x1]
    %v23 = vlaneseq
    %v24 = vshrl.u32 %v23, 7
    %v25 = vlaneseq
    %v26 = vshrl.u32 %v25, 7
    %v27 = vsub.s32 0, %v26
    %v28 = vrot.slane %v21, %v27
    %vm29 = vcmp.eq.s32.totalorder %v24, %v28
    %v30 = vsel %vm29, 1, 0
    %v31 = vcvt.s32.f32 %v30
    %v32 = vlaneseq
    %v33 = vshrl.u32 %v32, 7
    %v34 = vsub.s32 0, %v33
    %v35 = vrot.slane %v22, %v34
    %vm36 = vcmp.eq.s32.totalorder %v24, %v35
    %v37 = vsel %vm36, 1, 0
    %v38 = vcvt.s32.f32 %v37
    %v39 = vsub.f32 %v31, %v38
    %v40 = vld [vmem:[%s2] sm:$0xff]
    %v41 = vld [vmem:[%s2 + $0x8] sm:$0xff]
    %v42 = vld [vmem:[%s2 + $0x10] sm:$0xff]
    %v43 = vld [vmem:[%s2 + $0x18] sm:$0xff]
    %vm44 = vcmask 64512
    %v46 = vsel %vm44, %v40, 0
    %v49 = vsel %vm44, %v41, 0
    %v52 = vsel %vm44, %v42, 0
    %v55 = vsel %vm44, %v43, 0
    %57 = vmatprep.subr.mxu0 0.0
    %58 = vmatpush1.msra.mxu0 0.0
    %59 = vmatprep.subr.mxu0 0.0
    %60 = vmatpush1.msra.mxu0 0.0
    %61 = vmatprep.subr.mxu0 0.0
    %62 = vmatpush1.msra.mxu0 0.0
    %63 = vmatprep.subr.mxu0 0.0
    %64 = vmatpush1.msra.mxu0 0.0
    %65 = vmatprep.subr.mxu0 0.0
    %66 = vmatpush1.msra.mxu0 0.0
    %67 = vmatprep.subr.mxu0 0.0
    %68 = vmatpush1.msra.mxu0 0.0
    %69 = vmatprep.subr.mxu0 0.0
    %70 = vmatpush1.msra.mxu0 0.0
    %71 = vmatprep.subr.mxu0 0.0
    %72 = vmatpush1.msra.mxu0 0.0
    %73 = vmatprep.subr.mxu0 0.0
    %74 = vmatpush1.msra.mxu0 0.0
    %75 = vmatprep.subr.mxu0 0.0
    %76 = vmatpush1.msra.mxu0 0.0
    %77 = vmatprep.subr.mxu0 0.0
    %78 = vmatpush1.msra.mxu0 0.0
    %79 = vmatprep.subr.mxu0 0.0
    %80 = vmatpush1.msra.mxu0 0.0
    %81 = vmatprep.subr.mxu0 0.0
    %82 = vmatpush1.msra.mxu0 0.0
    %83 = vmatprep.subr.mxu0 0.0
    %84 = vmatpush1.msra.mxu0 0.0
    %85 = vmatprep.subr.mxu0 0.0
    %86 = vmatpush1.msra.mxu0 0.0
    %87 = vmatprep.subr.mxu0 0.0
    %88 = vmatpush1.msra.mxu0 %v39
    %89 = vmatprep.subr.mxu0 0.0
    %90 = vmatpush2.msra.mxu0 0.0
    %91 = vmatprep.subr.mxu0 0.0
    %92 = vmatpush2.msra.mxu0 0.0
    %93 = vmatprep.subr.mxu0 0.0
    %94 = vmatpush2.msra.mxu0 0.0
    %95 = vmatprep.subr.mxu0 0.0
    %96 = vmatpush2.msra.mxu0 0.0
    %97 = vmatprep.subr.mxu0 0.0
    %98 = vmatpush2.msra.mxu0 0.0
    %99 = vmatprep.subr.mxu0 0.0
    %100 = vmatpush2.msra.mxu0 0.0
    %101 = vmatprep.subr.mxu0 0.0
    %102 = vmatpush2.msra.mxu0 0.0
    %103 = vmatprep.subr.mxu0 0.0
    %104 = vmatpush2.msra.mxu0 0.0
    %105 = vmatprep.subr.mxu0 0.0
    %106 = vmatpush2.msra.mxu0 0.0
    %107 = vmatprep.subr.mxu0 0.0
    %108 = vmatpush2.msra.mxu0 0.0
    %109 = vmatprep.subr.mxu0 0.0
    %110 = vmatpush2.msra.mxu0 0.0
    %111 = vmatprep.subr.mxu0 0.0
    %112 = vmatpush2.msra.mxu0 0.0
    %113 = vmatprep.subr.mxu0 0.0
    %114 = vmatpush2.msra.mxu0 0.0
    %115 = vmatprep.subr.mxu0 0.0
    %116 = vmatpush2.msra.mxu0 0.0
    %117 = vmatprep.subr.mxu0 0.0
    %118 = vmatpush2.msra.mxu0 0.0
    %119 = vmatprep.subr.mxu0 0.0
    %120 = vmatpush2.msra.mxu0 0.0
    %121 = vmatprep.mubr.f32.mxu0 0.0
    %122 = vmatmul.mubr.f32.gmra.mxu0 %v46
    %v123 = vpop.f32.mrf.mxu0
    %v124 = vadd.f32 0.0, %v123
    %v125 = vpop.f32.mrf.mxu0
    %126 = vmatprep.mubr.f32.mxu0 0.0
    %127 = vmatmul.mubr.f32.gmra.mxu0 %v49
    %v128 = vpop.f32.mrf.mxu0
    %v129 = vadd.f32 0.0, %v128
    %v130 = vpop.f32.mrf.mxu0
    %131 = vmatprep.mubr.f32.mxu0 0.0
    %132 = vmatmul.mubr.f32.gmra.mxu0 %v52
    %v133 = vpop.f32.mrf.mxu0
    %v134 = vadd.f32 0.0, %v133
    %v135 = vpop.f32.mrf.mxu0
    %136 = vmatprep.mubr.f32.mxu0 0.0
    %137 = vmatmul.mubr.f32.gmra.mxu0 %v55
    %v138 = vpop.f32.mrf.mxu0
    %v139 = vadd.f32 0.0, %v138
    %v140 = vpop.f32.mrf.mxu0
    %141 = vdwg.mxu0
    %v142 = vmax.f32 %v124, 0.0
    %v143 = vmax.f32 %v129, 0.0
    %v144 = vmax.f32 %v134, 0.0
    %v145 = vmax.f32 %v139, 0.0
    %146 = vst [vmem:[#allocation2] sm:$0xff] %v142
    %147 = vst [vmem:[#allocation2 + $0x8] sm:$0xff] %v143
    %148 = vst [vmem:[#allocation2 + $0x10] sm:$0xff] %v144
    %149 = vst [vmem:[#allocation2 + $0x18] sm:$0xff] %v145
    %v150 = vld [vmem:[%s3] sm:$0xff]
    %v151 = vld [vmem:[%s3 + $0x8] sm:$0xff]
    %v152 = vld [vmem:[%s3 + $0x10] sm:$0xff]
    %v153 = vld [vmem:[%s3 + $0x18] sm:$0xff]
    %155 = vset.pattern.permute.xlu0 0
    %156 = vperm.xlu0 %155, %v150
    %v157 = vpop.permute.xlu0 %156
    %160 = vset.pattern.permute.xlu0 0
    %161 = vperm.xlu0 %160, %v151
    %v162 = vpop.permute.xlu0 %161
    %165 = vset.pattern.permute.xlu0 0
    %166 = vperm.xlu0 %165, %v152
    %v167 = vpop.permute.xlu0 %166
    %170 = vset.pattern.permute.xlu0 0
    %171 = vperm.xlu0 %170, %v153
    %v172 = vpop.permute.xlu0 %171
    %v174 = vmul.f32 %v142, %v157
    %v175 = vmul.f32 %v143, %v162
    %v176 = vmul.f32 %v144, %v167
    %v177 = vmul.f32 %v145, %v172
    %v178 = vadd.f32 %v174, %v175
    %v179 = vadd.f32 %v178, %v176
    %v180 = vadd.f32 %v179, %v177
    %v181 = vrot.slane %v180, 4
    %v182 = vadd.f32 %v180, %v181
    %v183 = vrot.slane %v182, 2
    %v184 = vadd.f32 %v182, %v183
    %v185 = vrot.slane %v184, 1
    %v186 = vadd.f32 %v184, %v185
    %187 = vst [vmem:[#allocation4] sm:$0x1] %v186
    // Predicated region
    $region18: #{tpu_custom_call.1} parent=1 // pred_check
      _
    $region19: #{tpu_custom_call.1} parent=1 // pred_check_branch
      %189 = sbr.rel (0) target = $region21
    $region20: #{tpu_custom_call.1} parent=1 // pred_region
      %s191 = ssub.s32 512, 512
      %192 = vsyncadd [#allocation3], %s191
      %s193 = sshll.u32 [#allocation2], 4
      %s194 = int_to_ptr.vmem [resolvable:$true] %s193
      %199 = dma.vmem_to_hbm [thread:$0]  %s194, 512, %s4, [#allocation3], 128, 128, 8
    $region21: #{tpu_custom_call.1} parent=1 // pred_fallthru
      _
    // Predicated region
    $region22: #{tpu_custom_call.1} parent=1 // pred_check
      _
    $region23: #{tpu_custom_call.1} parent=1 // pred_check_branch
      %201 = sbr.rel (0) target = $region25
    $region24: #{tpu_custom_call.1} parent=1 // pred_region
      %s203 = ssub.s32 16, 16
      %204 = vsyncadd [#allocation5], %s203
      %s206 = sshll.u32 [#allocation4], 4
      %s207 = int_to_ptr.vmem [resolvable:$true] %s206
      %209 = dma.vmem_to_hbm [thread:$0]  %s207, 16, %s5, [#allocation5]
    $region25: #{tpu_custom_call.1} parent=1 // pred_fallthru
      _
    // Predicated region
    $region26: #{tpu_custom_call.1} parent=1 // pred_check
      _
    $region27: #{tpu_custom_call.1} parent=1 // pred_check_branch
      %211 = sbr.rel (0) target = $region29
    $region28: #{tpu_custom_call.1} parent=1 // pred_region
      %212 = dma.done [#allocation3], 512
    $region29: #{tpu_custom_call.1} parent=1 // pred_fallthru
      _
    // Predicated region
    $region30: #{tpu_custom_call.1} parent=1 // pred_check
      _
    $region31: #{tpu_custom_call.1} parent=1 // pred_check_branch
      %214 = sbr.rel (0) target = $region33
    $region32: #{tpu_custom_call.1} parent=1 // pred_region
      %215 = dma.done [#allocation5], 16
    $region33: #{tpu_custom_call.1} parent=1 // pred_fallthru
      _
    %216 = vsyncpa [#allocation3], 1
    %217 = vsyncpa [#allocation5], 1

</llo_original>
